<compile_context>
chip_gen: v6e
topology: v6e:2x2x1
jax: 0.10.0
libtpu: 0.0.40
codegen_flags: <defaults>
</compile_context>

<pallas_src>
import functools

import jax
import jax.numpy as jnp
from jax.experimental import pallas as pl
from jax.experimental.pallas import tpu as pltpu

HIDDEN = 100      # real hidden width of the PyTorch module
H_PAD = 128       # lane-padded hidden / head width
TB_MAX = 512      # batch tile for the gridded (serving) path


def _round_up(n, m):
    return ((n + m - 1) // m) * m


def _network_kernel(nrows_ref, x_ref, p_ref, q_ref, asum_ref, *,
                    d_in, d_in_pad, d_out, tb):
    """Fused forward: two ReLU-Linear layers + fused dueling head.

    p_ref row layout (bf16, 128 lanes wide, 8-row aligned sections):
      [0, d_in_pad)                : W1 (real rows [0,d_in), cols [0,100))
      [d_in_pad, d_in_pad+128)     : W2; row 127 = b2 (const-1 channel),
                                     [127,127] = 1 keeps the channel alive
      [d_in_pad+128, d_in_pad+256) : W_head
           cols [0, d_out)        = wa + wv  (row 127 = ba + bv)
           cols [d_out, 2*d_out)  = wa       (row 127 = ba)
      [d_in_pad+256, +8)           : row 0 = b1, with lane 127 = 1.0
    """
    i = pl.program_id(0)

    w1 = p_ref[0:d_in, :]
    w2 = p_ref[d_in_pad:d_in_pad + H_PAD, :]
    wh = p_ref[d_in_pad + H_PAD:d_in_pad + 2 * H_PAD, :]
    b1 = p_ref[d_in_pad + 2 * H_PAD:d_in_pad + 2 * H_PAD + 1, :]   # (1, 128)

    x = x_ref[...]                                                  # bf16

    # Layer 1: bf16 MXU matmul, f32 accumulate, f32 ReLU, downcast for layer 2.
    h1 = jnp.maximum(
        jnp.dot(x, w1, preferred_element_type=jnp.float32)
        + b1.astype(jnp.float32), 0.0).astype(jnp.bfloat16)
    # Layer 2: b2 is carried by the constant-1 channel inside w2.
    h2 = jnp.maximum(
        jnp.dot(h1, w2, preferred_element_type=jnp.float32),
        0.0).astype(jnp.bfloat16)
    # Fused dueling head (biases folded in): cols [0,d_out)=V+a, [d_out,2d)=a.
    ho = jnp.dot(h2, wh, preferred_element_type=jnp.float32)        # (tb,128)

    # Partial sum of the REAL `a` elements of this batch tile.
    rows = jax.lax.broadcasted_iota(jnp.int32, ho.shape, 0) + i * tb
    cols = jax.lax.broadcasted_iota(jnp.int32, ho.shape, 1)
    mask = (rows < nrows_ref[0]) & (cols >= d_out)   # cols>=2*d_out are exactly 0
    part = jnp.sum(jnp.where(mask, ho, 0.0))

    @pl.when(i == 0)
    def _():
        asum_ref[...] = jnp.zeros_like(asum_ref)
    asum_ref[...] += part        # scalar splat; every element holds the total

    q_ref[...] = ho.astype(q_ref.dtype)


def pack_params(params, input_dimension, output_dimension):
    """Pack the 8 parameter tensors into one lane-dense bf16 (rows, 128) buffer.

    NOTE: weights are expected in (in, out) layout.  PyTorch nn.Linear stores
    (out, in) -- transpose a torch state_dict before packing.
    """
    assert 2 * output_dimension <= H_PAD, "output_dimension too large for fused head"
    w1, b1, w2, b2, wv, bv, wa, ba = params
    assert w1.shape == (input_dimension, HIDDEN)
    assert w2.shape == (HIDDEN, HIDDEN)
    assert wv.shape == (HIDDEN, 1)
    assert wa.shape == (HIDDEN, output_dimension)

    d_in_pad = _round_up(input_dimension, 8)
    f32 = jnp.float32

    w1p = jnp.zeros((d_in_pad, H_PAD), f32)
    w1p = w1p.at[:input_dimension, :HIDDEN].set(w1.astype(f32))

    w2p = jnp.zeros((H_PAD, H_PAD), f32)
    w2p = w2p.at[:HIDDEN, :HIDDEN].set(w2.astype(f32))
    w2p = w2p.at[H_PAD - 1, :HIDDEN].set(b2.reshape(-1).astype(f32))  # b2 via const-1
    w2p = w2p.at[H_PAD - 1, H_PAD - 1].set(1.0)                       # keep channel = 1

    whp = jnp.zeros((H_PAD, H_PAD), f32)
    whp = whp.at[:HIDDEN, :output_dimension].set((wa + wv).astype(f32))
    whp = whp.at[:HIDDEN, output_dimension:2 * output_dimension].set(wa.astype(f32))
    whp = whp.at[H_PAD - 1, :output_dimension].set((ba + bv).reshape(-1).astype(f32))
    whp = whp.at[H_PAD - 1, output_dimension:2 * output_dimension].set(
        ba.reshape(-1).astype(f32))

    b1p = jnp.zeros((8, H_PAD), f32)
    b1p = b1p.at[0, :HIDDEN].set(b1.reshape(-1).astype(f32))
    b1p = b1p.at[0, H_PAD - 1].set(1.0)                               # const-1 source

    return jnp.concatenate([w1p, w2p, whp, b1p], axis=0).astype(jnp.bfloat16)


def network_forward(x, packed_params, input_dimension, output_dimension):
    """Full Network forward: one Pallas call + a tiny wrapper-side mean finalize."""
    B = x.shape[0]
    if B == 0:
        return jnp.zeros((0, output_dimension), jnp.float32)

    d_in = input_dimension
    d_in_pad = _round_up(d_in, 8)
    x_bf = x.astype(jnp.bfloat16)      # matches input.float(), halved DMA bytes

    if B <= TB_MAX:
        tb, nb = B, 1                  # single full-array block (exempt from 8/128 rule)
    else:
        tb = TB_MAX
        nb = (B + tb - 1) // tb        # weight-resident batch grid, pipelined

    kernel = functools.partial(_network_kernel, d_in=d_in, d_in_pad=d_in_pad,
                               d_out=output_dimension, tb=tb)
    n_rows = jnp.array([B], jnp.int32)

    grid_spec = pltpu.PrefetchScalarGridSpec(
        num_scalar_prefetch=1,
        grid=(nb,),
        in_specs=[
            pl.BlockSpec((tb, d_in), lambda i, n: (i, 0)),            # x tile
            pl.BlockSpec(packed_params.shape, lambda i, n: (0, 0)),   # weights resident
        ],
        out_specs=[
            pl.BlockSpec((tb, H_PAD), lambda i, n: (i, 0)),           # lane-dense q
            pl.BlockSpec((8, H_PAD), lambda i, n: (0, 0)),            # a-sum accumulator
        ],
    )

    q_wide, a_sum_tile = pl.pallas_call(
        kernel,
        out_shape=(jax.ShapeDtypeStruct((B, H_PAD), jnp.float32),
                   jax.ShapeDtypeStruct((8, H_PAD), jnp.float32)),
        grid_spec=grid_spec,
        compiler_params=pltpu.CompilerParams(
            dimension_semantics=("arbitrary",)),   # accumulator output -> arbitrary
    )(n_rows, x_bf, packed_params)

    a_mean = a_sum_tile[0, 0] / jnp.float32(B * output_dimension)
    # Columns [0, d_out) already hold V + a; cheap finalize over (B, d_out).
    return q_wide[:, :output_dimension] - a_mean


def init_params(key, input_dimension, output_dimension, hidden=HIDDEN):
    """PyTorch-default Linear init, weights stored as (in, out)."""
    def linear(key, fan_in, fan_out):
        kw, kb = jax.random.split(key)
        bound = 1.0 / jnp.sqrt(jnp.float32(fan_in))
        w = jax.random.uniform(kw, (fan_in, fan_out), jnp.float32, -bound, bound)
        b = jax.random.uniform(kb, (1, fan_out), jnp.float32, -bound, bound)
        return w, b

    k1, k2, k3, k4 = jax.random.split(key, 4)
    w1, b1 = linear(k1, input_dimension, hidden)
    w2, b2 = linear(k2, hidden, hidden)
    wv, bv = linear(k3, hidden, 1)
    wa, ba = linear(k4, hidden, output_dimension)
    return (w1, b1, w2, b2, wv, bv, wa, ba)


def network_reference(x, params):
    """Plain-JAX f32 reference (unpadded, unfused)."""
    w1, b1, w2, b2, wv, bv, wa, ba = params
    h1 = jnp.maximum(x @ w1 + b1, 0.0)
    h2 = jnp.maximum(h1 @ w2 + b2, 0.0)
    v = h2 @ wv + bv
    a = h2 @ wa + ba
    return v + a - jnp.mean(a)


if __name__ == "__main__":
    key = jax.random.PRNGKey(0)
    k_params, k_x = jax.random.split(key)

    batch = 8
    input_dimension = 32
    output_dimension = 4

    params = init_params(k_params, input_dimension, output_dimension)
    packed = pack_params(params, input_dimension, output_dimension)
    x = jax.random.normal(k_x, (batch, input_dimension), dtype=jnp.float32)

    q = network_forward(x, packed, input_dimension, output_dimension)
    q = jax.block_until_ready(q)

    q_ref = network_reference(x, params)
    assert q.shape == (batch, output_dimension)
    # bf16 weights/activations with f32 accumulation -> ~1e-2-level deviation.
    assert jnp.allclose(q, q_ref, atol=5e-2, rtol=5e-2), "mismatch vs reference"

    print("KERNEL_OK")
</pallas_src>

<mosaic_0001>
module attributes {stable_mosaic.version = 11 : i64} {
  func.func @_network_kernel(%arg0: i32, %arg1: memref<1xi32, #tpu.memory_space<smem>>, %arg2: memref<8x32xbf16, #tpu.memory_space<vmem>>, %arg3: memref<296x128xbf16, #tpu.memory_space<vmem>>, %arg4: memref<8x128xf32, #tpu.memory_space<vmem>>, %arg5: memref<8x128xf32, #tpu.memory_space<vmem>>) attributes {dimension_semantics = [#tpu.dimension_semantics<arbitrary>], iteration_bounds = array<i64: 1>, scalar_prefetch = 1 : i64, scratch_operands = 0 : i64, tpu.core_type = #tpu.core_type<tc>, window_params = [{transform_indices = @transform_0, window_bounds = array<i64: 8, 32>}, {pipeline_mode = #tpu.pipeline_mode<synchronous>, transform_indices = @transform_1, window_bounds = array<i64: 296, 128>}, {transform_indices = @transform_2, window_bounds = array<i64: 8, 128>}, {pipeline_mode = #tpu.pipeline_mode<synchronous>, transform_indices = @transform_3, window_bounds = array<i64: 8, 128>}]} {
    %c0 = arith.constant 0 : index
    %c0_0 = arith.constant 0 : index
    %0 = vector.load %arg3[%c0, %c0_0] : memref<296x128xbf16, #tpu.memory_space<vmem>>, vector<32x128xbf16>
    %c32 = arith.constant 32 : index
    %c0_1 = arith.constant 0 : index
    %1 = vector.load %arg3[%c32, %c0_1] : memref<296x128xbf16, #tpu.memory_space<vmem>>, vector<128x128xbf16>
    %c160 = arith.constant 160 : index
    %c0_2 = arith.constant 0 : index
    %2 = vector.load %arg3[%c160, %c0_2] : memref<296x128xbf16, #tpu.memory_space<vmem>>, vector<128x128xbf16>
    %c288 = arith.constant 288 : index
    %c0_3 = arith.constant 0 : index
    %3 = vector.load %arg3[%c288, %c0_3] : memref<296x128xbf16, #tpu.memory_space<vmem>>, vector<1x128xbf16>
    %c0_4 = arith.constant 0 : index
    %c0_5 = arith.constant 0 : index
    %4 = vector.load %arg2[%c0_4, %c0_5] : memref<8x32xbf16, #tpu.memory_space<vmem>>, vector<8x32xbf16>
    %cst = arith.constant dense<0.000000e+00> : vector<8x128xf32>
    %5 = tpu.matmul %4, %0, %cst {dimension_numbers = #tpu.dot_dimension_numbers<[1], [0], [0], [1], [0, 0, 1, 1], [], []>} : vector<8x32xbf16>, vector<32x128xbf16>, vector<8x128xf32> -> vector<8x128xf32>
    %6 = arith.extf %3 : vector<1x128xbf16> to vector<1x128xf32>
    %7 = vector.broadcast %6 : vector<1x128xf32> to vector<8x128xf32>
    %8 = arith.addf %5, %7 : vector<8x128xf32>
    %cst_6 = arith.constant 0.000000e+00 : f32
    %9 = vector.broadcast %cst_6 : f32 to vector<8x128xf32>
    %10 = arith.maximumf %8, %9 : vector<8x128xf32>
    %11 = arith.truncf %10 : vector<8x128xf32> to vector<8x128xbf16>
    %cst_7 = arith.constant dense<0.000000e+00> : vector<8x128xf32>
    %12 = tpu.matmul %11, %1, %cst_7 {dimension_numbers = #tpu.dot_dimension_numbers<[1], [0], [0], [1], [0, 0, 1, 1], [], []>} : vector<8x128xbf16>, vector<128x128xbf16>, vector<8x128xf32> -> vector<8x128xf32>
    %cst_8 = arith.constant 0.000000e+00 : f32
    %13 = vector.broadcast %cst_8 : f32 to vector<8x128xf32>
    %14 = arith.maximumf %12, %13 : vector<8x128xf32>
    %15 = arith.truncf %14 : vector<8x128xf32> to vector<8x128xbf16>
    %cst_9 = arith.constant dense<0.000000e+00> : vector<8x128xf32>
    %16 = tpu.matmul %15, %2, %cst_9 {dimension_numbers = #tpu.dot_dimension_numbers<[1], [0], [0], [1], [0, 0, 1, 1], [], []>} : vector<8x128xbf16>, vector<128x128xbf16>, vector<8x128xf32> -> vector<8x128xf32>
    %17 = tpu.iota {dimensions = array<i32: 0>} : vector<8x128xi32>
    %c8_i32 = arith.constant 8 : i32
    %18 = arith.muli %arg0, %c8_i32 : i32
    %19 = vector.broadcast %18 : i32 to vector<8x128xi32>
    %20 = arith.addi %17, %19 : vector<8x128xi32>
    %21 = tpu.iota {dimensions = array<i32: 1>} : vector<8x128xi32>
    %c0_10 = arith.constant 0 : index
    %22 = memref.load %arg1[%c0_10] : memref<1xi32, #tpu.memory_space<smem>>
    %23 = vector.broadcast %22 : i32 to vector<8x128xi32>
    %24 = arith.cmpi slt, %20, %23 : vector<8x128xi32>
    %c4_i32 = arith.constant 4 : i32
    %25 = vector.broadcast %c4_i32 : i32 to vector<8x128xi32>
    %26 = arith.cmpi sge, %21, %25 : vector<8x128xi32>
    %27 = arith.andi %24, %26 : vector<8x128xi1>
    %cst_11 = arith.constant 0.000000e+00 : f32
    %28 = vector.broadcast %cst_11 : f32 to vector<8x128xf32>
    %29 = arith.select %27, %16, %28 : vector<8x128xi1>, vector<8x128xf32>
    %30 = vector.shape_cast %29 : vector<8x128xf32> to vector<1x8x128xf32>
    %cst_12 = arith.constant dense<0.000000e+00> : vector<1xf32>
    %31 = vector.multi_reduction <add>, %30, %cst_12 [1, 2] : vector<1x8x128xf32> to vector<1xf32>
    %32 = vector.shape_cast %31 : vector<1xf32> to vector<1x1x1xf32>
    %33 = vector.extract %32[0, 0, 0] : f32 from vector<1x1x1xf32>
    %c0_i32 = arith.constant 0 : i32
    %34 = arith.cmpi eq, %arg0, %c0_i32 : i32
    %35 = arith.extui %34 : i1 to i32
    %c0_i32_13 = arith.constant 0 : i32
    %36 = arith.cmpi ne, %35, %c0_i32_13 : i32
    scf.if %36 {
      %cst_20 = arith.constant 0.000000e+00 : f32
      %42 = vector.broadcast %cst_20 : f32 to vector<8x128xf32>
      %c0_21 = arith.constant 0 : index
      %c0_22 = arith.constant 0 : index
      %43 = vector.load %arg5[%c0_21, %c0_22] : memref<8x128xf32, #tpu.memory_space<vmem>>, vector<8x128xf32>
      tpu.vector_store %arg5[%c0_21, %c0_22], %42 {strides = array<i32>} : memref<8x128xf32, #tpu.memory_space<vmem>>, vector<8x128xf32>,
    } else {
    }
    %c0_14 = arith.constant 0 : index
    %c0_15 = arith.constant 0 : index
    %37 = vector.load %arg5[%c0_14, %c0_15] : memref<8x128xf32, #tpu.memory_space<vmem>>, vector<8x128xf32>
    %38 = vector.broadcast %33 : f32 to vector<8x128xf32>
    %39 = arith.addf %37, %38 : vector<8x128xf32>
    %c0_16 = arith.constant 0 : index
    %c0_17 = arith.constant 0 : index
    %40 = vector.load %arg5[%c0_16, %c0_17] : memref<8x128xf32, #tpu.memory_space<vmem>>, vector<8x128xf32>
    tpu.vector_store %arg5[%c0_16, %c0_17], %39 {strides = array<i32>} : memref<8x128xf32, #tpu.memory_space<vmem>>, vector<8x128xf32>,
    %c0_18 = arith.constant 0 : index
    %c0_19 = arith.constant 0 : index
    %41 = vector.load %arg4[%c0_18, %c0_19] : memref<8x128xf32, #tpu.memory_space<vmem>>, vector<8x128xf32>
    tpu.vector_store %arg4[%c0_18, %c0_19], %16 {strides = array<i32>} : memref<8x128xf32, #tpu.memory_space<vmem>>, vector<8x128xf32>,
    return
  }
  func.func @transform_0(%arg0: i32, %arg1: memref<1xi32, #tpu.memory_space<smem>>) -> (i32, i32) {
    %c0_i32 = arith.constant 0 : i32
    %c0_i32_0 = arith.constant 0 : i32
    return %arg0, %c0_i32 : i32, i32
  }
  func.func @transform_1(%arg0: i32, %arg1: memref<1xi32, #tpu.memory_space<smem>>) -> (i32, i32) {
    %c0_i32 = arith.constant 0 : i32
    %c0_i32_0 = arith.constant 0 : i32
    %c0_i32_1 = arith.constant 0 : i32
    return %c0_i32, %c0_i32_0 : i32, i32
  }
  func.func @transform_2(%arg0: i32, %arg1: memref<1xi32, #tpu.memory_space<smem>>) -> (i32, i32) {
    %c0_i32 = arith.constant 0 : i32
    %c0_i32_0 = arith.constant 0 : i32
    return %arg0, %c0_i32 : i32, i32
  }
  func.func @transform_3(%arg0: i32, %arg1: memref<1xi32, #tpu.memory_space<smem>>) -> (i32, i32) {
    %c0_i32 = arith.constant 0 : i32
    %c0_i32_0 = arith.constant 0 : i32
    %c0_i32_1 = arith.constant 0 : i32
    return %c0_i32, %c0_i32_0 : i32, i32
  }
}

</mosaic_0001>

<llo_original>
// kernel: tpu_custom_call.1
$region0: #{tpu_custom_call.1}
  #allocation0 [shape = 'u32[]', space=smem, size = 0x4, offset = 0x4, fixed_abs, tag = 'smem constant byte address 0x4 - core index']
  #allocation1 [shape = 'u32[144,128]{1,0:T(1,128)}', space=vmem, size = 0x12000, scoped, tag = 'internal scratch']
  #allocation2 [shape = 's32[1]{0}', space=sflag, size = 0x4, scoped, tag = 'scoped memory for tpu_custom_call.1']
  #allocation3 [shape = 's32[1]{0:T(128)S(6)}', space=smem, size = 0x200, scoped, tag = 'prefetched SMEM operand 0']
  %s0 = inlined_call_operand.<no memory space> [shape: s32[1], index: 0, kind: input, shape index: {}]
  %s1 = inlined_call_operand.hbm [shape: bf16[8,32], index: 1, kind: input, shape index: {}]
  %s2 = inlined_call_operand.hbm [shape: bf16[296,128], index: 2, kind: input, shape index: {}]
  %s3 = inlined_call_operand.hbm [shape: f32[8,128], index: 3, kind: output, shape index: {0}]
  %s4 = inlined_call_operand.hbm [shape: f32[8,128], index: 4, kind: output, shape index: {1}]
  %5 = xla_tuple %s3, %s4
  %s6 = sld [smem:[#allocation0]]
  $region38: #{tpu_custom_call.1} parent=0
    _
  %s8 = ssub.s32 1, %s6
  %s9 = scalar_select 0, %s8, %s6
  %10 = sst [smem:[#allocation3]] %s0
  $region1: #{tpu_custom_call.1} parent=0
    #allocation4 [shape = 'u8[2048]{0}', space=vmem, size = 0x800, scoped, tag = 'input window, operand 1, single buffered']
    #allocation5 [shape = 's32[1]{0}', space=sflag, size = 0x4, scoped, tag = 'scoped memory for tpu_custom_call.1']
    #allocation6 [shape = 's32[1]{0}', space=sflag, size = 0x4, scoped, tag = 'scoped memory for tpu_custom_call.1']
    #allocation7 [shape = 'u8[75776]{0}', space=vmem, size = 0x12800, scoped, tag = 'input window, operand 2, single buffered']
    #allocation8 [shape = 's32[1]{0}', space=sflag, size = 0x4, scoped, tag = 'scoped memory for tpu_custom_call.1']
    #allocation9 [shape = 'u8[4096]{0}', space=vmem, size = 0x1000, scoped, tag = 'output window, operand 0, single buffered']
    #allocation10 [shape = 'u8[4096]{0}', space=vmem, size = 0x1000, scoped, tag = 'output window, operand 1, single buffered']
    #allocation11 [shape = 's32[1]{0}', space=sflag, size = 0x4, scoped, tag = 'scoped memory for tpu_custom_call.1']
    %11 = vsyncpa [#allocation5], 0
    %12 = vsyncpa [#allocation8], 0
    %13 = vsyncpa [#allocation6], 0
    %14 = vsyncpa [#allocation11], 0
    // Predicated region
    $region2: #{tpu_custom_call.1} parent=1 // pred_check
      _
    $region3: #{tpu_custom_call.1} parent=1 // pred_check_branch
      %16 = sbr.rel (0) target = $region5
    $region4: #{tpu_custom_call.1} parent=1 // pred_region
      %s18 = ssub.s32 64, 64
      %19 = vsyncadd [#allocation5], %s18
      %s21 = sshll.u32 [#allocation4], 4
      %s22 = int_to_ptr.vmem [resolvable:$true] %s21
      %24 = dma.hbm_to_vmem [thread:$0]  %s1, 64, %s22, [#allocation5]
    $region5: #{tpu_custom_call.1} parent=1 // pred_fallthru
      _
    // Predicated region
    $region6: #{tpu_custom_call.1} parent=1 // pred_check
      _
    $region7: #{tpu_custom_call.1} parent=1 // pred_check_branch
      %26 = sbr.rel (0) target = $region9
    $region8: #{tpu_custom_call.1} parent=1 // pred_region
      %s28 = ssub.s32 2368, 2368
      %29 = vsyncadd [#allocation8], %s28
      %s30 = sshll.u32 [#allocation7], 4
      %s31 = int_to_ptr.vmem [resolvable:$true] %s30
      %36 = dma.hbm_to_vmem [thread:$0]  %s2, 2368, %s31, [#allocation8], 64, 64, 4
    $region9: #{tpu_custom_call.1} parent=1 // pred_fallthru
      _
    // Predicated region
    $region10: #{tpu_custom_call.1} parent=1 // pred_check
      _
    $region11: #{tpu_custom_call.1} parent=1 // pred_check_branch
      %38 = sbr.rel (0) target = $region13
    $region12: #{tpu_custom_call.1} parent=1 // pred_region
      %39 = dma.done [#allocation5], 64
    $region13: #{tpu_custom_call.1} parent=1 // pred_fallthru
      _
    // Predicated region
    $region14: #{tpu_custom_call.1} parent=1 // pred_check
      _
    $region15: #{tpu_custom_call.1} parent=1 // pred_check_branch
      %41 = sbr.rel (0) target = $region17
    $region16: #{tpu_custom_call.1} parent=1 // pred_region
      %42 = dma.done [#allocation8], 2368
    $region17: #{tpu_custom_call.1} parent=1 // pred_fallthru
      _
    %v44 = vld [vmem:[#allocation7] sm:$0xf]
    %v45 = vld [vmem:[#allocation7 + $0x4] sm:$0xf]
    %v46 = vld [vmem:[#allocation7 + $0x8] sm:$0xf]
    %v47 = vld [vmem:[#allocation7 + $0xc] sm:$0xf]
    %v48 = vld [vmem:[#allocation7 + $0x10] sm:$0xf]
    %v49 = vld [vmem:[#allocation7 + $0x14] sm:$0xf]
    %v50 = vld [vmem:[#allocation7 + $0x18] sm:$0xf]
    %v51 = vld [vmem:[#allocation7 + $0x1c] sm:$0xf]
    %v52 = vld [vmem:[#allocation7 + $0x20] sm:$0xf]
    %v53 = vld [vmem:[#allocation7 + $0x24] sm:$0xf]
    %v54 = vld [vmem:[#allocation7 + $0x28] sm:$0xf]
    %v55 = vld [vmem:[#allocation7 + $0x2c] sm:$0xf]
    %v56 = vld [vmem:[#allocation7 + $0x30] sm:$0xf]
    %v57 = vld [vmem:[#allocation7 + $0x34] sm:$0xf]
    %v58 = vld [vmem:[#allocation7 + $0x38] sm:$0xf]
    %v59 = vld [vmem:[#allocation7 + $0x3c] sm:$0xf]
    %v60 = vld [vmem:[#allocation7 + $0x40] sm:$0xf]
    %v61 = vld [vmem:[#allocation7 + $0x44] sm:$0xf]
    %v62 = vld [vmem:[#allocation7 + $0x48] sm:$0xf]
    %v63 = vld [vmem:[#allocation7 + $0x4c] sm:$0xf]
    %v64 = vld [vmem:[#allocation7 + $0x50] sm:$0xf]
    %v65 = vld [vmem:[#allocation7 + $0x54] sm:$0xf]
    %v66 = vld [vmem:[#allocation7 + $0x58] sm:$0xf]
    %v67 = vld [vmem:[#allocation7 + $0x5c] sm:$0xf]
    %v68 = vld [vmem:[#allocation7 + $0x60] sm:$0xf]
    %v69 = vld [vmem:[#allocation7 + $0x64] sm:$0xf]
    %v70 = vld [vmem:[#allocation7 + $0x68] sm:$0xf]
    %v71 = vld [vmem:[#allocation7 + $0x6c] sm:$0xf]
    %v72 = vld [vmem:[#allocation7 + $0x70] sm:$0xf]
    %v73 = vld [vmem:[#allocation7 + $0x74] sm:$0xf]
    %v74 = vld [vmem:[#allocation7 + $0x78] sm:$0xf]
    %v75 = vld [vmem:[#allocation7 + $0x7c] sm:$0xf]
    %v76 = vld [vmem:[#allocation7 + $0x80] sm:$0xf]
    %v77 = vld [vmem:[#allocation7 + $0x84] sm:$0xf]
    %v78 = vld [vmem:[#allocation7 + $0x88] sm:$0xf]
    %v79 = vld [vmem:[#allocation7 + $0x8c] sm:$0xf]
    %v80 = vld [vmem:[#allocation7 + $0x90] sm:$0x1]
    %v81 = vld [vmem:[#allocation4] sm:$0xf]
    %v82 = vunpack.c.l.bf16 %v80
    %v83 = vlaneseq
    %v84 = vshrl.u32 %v83, 7
    %v85 = vsub.s32 0, %v84
    %v86 = vrot.slane %v82, %v85
    %v91 = vunpack.c.l.b16 %v44
    %v92 = vunpack.c.l.b16 %v45
    %v93 = vunpack.c.l.b16 %v46
    %v94 = vunpack.c.l.b16 %v47
    %v95 = vpack.c.b16 %v92, %v91
    %v96 = vpack.c.b16 %v94, %v93
    %vm99 = vcmask 261120
    %v101 = vsel %vm99, %v81, 0
    %103 = vmatprep.subr.bf16.mxu0 0
    %104 = vmatpush1.bf16.msra.mxu0 0
    %105 = vmatprep.subr.bf16.mxu0 0
    %106 = vmatpush1.bf16.msra.mxu0 0
    %107 = vmatprep.subr.bf16.mxu0 0
    %108 = vmatpush1.bf16.msra.mxu0 0
    %109 = vmatprep.subr.bf16.mxu0 0
    %110 = vmatpush1.bf16.msra.mxu0 0
    %111 = vmatprep.subr.bf16.mxu0 0
    %112 = vmatpush1.bf16.msra.mxu0 0
    %113 = vmatprep.subr.bf16.mxu0 0
    %114 = vmatpush1.bf16.msra.mxu0 0
    %115 = vmatprep.subr.bf16.mxu0 0
    %116 = vmatpush1.bf16.msra.mxu0 %v96
    %117 = vmatprep.subr.bf16.mxu0 0
    %118 = vmatpush1.bf16.msra.mxu0 %v95
    %119 = vmatprep.subr.bf16.mxu0 0
    %120 = vmatpush2.bf16.msra.mxu0 0
    %121 = vmatprep.subr.bf16.mxu0 0
    %122 = vmatpush2.bf16.msra.mxu0 0
    %123 = vmatprep.subr.bf16.mxu0 0
    %124 = vmatpush2.bf16.msra.mxu0 0
    %125 = vmatprep.subr.bf16.mxu0 0
    %126 = vmatpush2.bf16.msra.mxu0 0
    %127 = vmatprep.subr.bf16.mxu0 0
    %128 = vmatpush2.bf16.msra.mxu0 0
    %129 = vmatprep.subr.bf16.mxu0 0
    %130 = vmatpush2.bf16.msra.mxu0 0
    %131 = vmatprep.subr.bf16.mxu0 0
    %132 = vmatpush2.bf16.msra.mxu0 0
    %133 = vmatprep.subr.bf16.mxu0 0
    %134 = vmatpush2.bf16.msra.mxu0 0
    %135 = vmatprep.mubr.bf16.mxu0 0
    %136 = vmatmul.mubr.bf16.gmra.mxu0 %v101
    %v137 = vpop.f32.mrf.mxu0
    %v138 = vadd.f32 %v86, %v137
    %v139 = vpop.f32.mrf.mxu0
    %v140 = vpop.f32.mrf.mxu0
    %v141 = vpop.f32.mrf.mxu0
    %142 = vdwg.mxu0
    %v143 = vmax.f32 %v138, 0.0
    %v144 = vpack.c.bf16 %v143, %v143
    %v161 = vunpack.c.l.b16 %v48
    %v162 = vunpack.c.l.b16 %v49
    %v163 = vunpack.c.l.b16 %v50
    %v164 = vunpack.c.l.b16 %v51
    %v165 = vunpack.c.l.b16 %v52
    %v166 = vunpack.c.l.b16 %v53
    %v167 = vunpack.c.l.b16 %v54
    %v168 = vunpack.c.l.b16 %v55
    %v169 = vunpack.c.l.b16 %v56
    %v170 = vunpack.c.l.b16 %v57
    %v171 = vunpack.c.l.b16 %v58
    %v172 = vunpack.c.l.b16 %v59
    %v173 = vunpack.c.l.b16 %v60
    %v174 = vunpack.c.l.b16 %v61
    %v175 = vunpack.c.l.b16 %v62
    %v176 = vunpack.c.l.b16 %v63
    %v177 = vpack.c.b16 %v162, %v161
    %v178 = vpack.c.b16 %v164, %v163
    %v179 = vpack.c.b16 %v166, %v165
    %v180 = vpack.c.b16 %v168, %v167
    %v181 = vpack.c.b16 %v170, %v169
    %v182 = vpack.c.b16 %v172, %v171
    %v183 = vpack.c.b16 %v174, %v173
    %v184 = vpack.c.b16 %v176, %v175
    %193 = vmatprep.subr.bf16.mxu0 0
    %194 = vmatpush1.bf16.msra.mxu0 %v184
    %195 = vmatprep.subr.bf16.mxu0 0
    %196 = vmatpush1.bf16.msra.mxu0 %v183
    %197 = vmatprep.subr.bf16.mxu0 0
    %198 = vmatpush1.bf16.msra.mxu0 %v182
    %199 = vmatprep.subr.bf16.mxu0 0
    %200 = vmatpush1.bf16.msra.mxu0 %v181
    %201 = vmatprep.subr.bf16.mxu0 0
    %202 = vmatpush1.bf16.msra.mxu0 %v180
    %203 = vmatprep.subr.bf16.mxu0 0
    %204 = vmatpush1.bf16.msra.mxu0 %v179
    %205 = vmatprep.subr.bf16.mxu0 0
    %206 = vmatpush1.bf16.msra.mxu0 %v178
    %207 = vmatprep.subr.bf16.mxu0 0
    %208 = vmatpush1.bf16.msra.mxu0 %v177
    %209 = vmatprep.subr.bf16.mxu0 0
    %210 = vmatpush2.bf16.msra.mxu0 0
    %211 = vmatprep.subr.bf16.mxu0 0
    %212 = vmatpush2.bf16.msra.mxu0 0
    %213 = vmatprep.subr.bf16.mxu0 0
    %214 = vmatpush2.bf16.msra.mxu0 0
    %215 = vmatprep.subr.bf16.mxu0 0
    %216 = vmatpush2.bf16.msra.mxu0 0
    %217 = vmatprep.subr.bf16.mxu0 0
    %218 = vmatpush2.bf16.msra.mxu0 0
    %219 = vmatprep.subr.bf16.mxu0 0
    %220 = vmatpush2.bf16.msra.mxu0 0
    %221 = vmatprep.subr.bf16.mxu0 0
    %222 = vmatpush2.bf16.msra.mxu0 0
    %223 = vmatprep.subr.bf16.mxu0 0
    %224 = vmatpush2.bf16.msra.mxu0 0
    %225 = vmatprep.mubr.bf16.mxu0 0
    %226 = vmatmul.mubr.bf16.gmra.mxu0 %v144
    %v227 = vpop.f32.mrf.mxu0
    %v228 = vadd.f32 0.0, %v227
    %v229 = vpop.f32.mrf.mxu0
    %v230 = vpop.f32.mrf.mxu0
    %v231 = vpop.f32.mrf.mxu0
    %232 = vdwg.mxu0
    %v233 = vmax.f32 %v228, 0.0
    %v234 = vpack.c.bf16 %v233, %v233
    %v251 = vunpack.c.l.b16 %v64
    %v252 = vunpack.c.l.b16 %v65
    %v253 = vunpack.c.l.b16 %v66
    %v254 = vunpack.c.l.b16 %v67
    %v255 = vunpack.c.l.b16 %v68
    %v256 = vunpack.c.l.b16 %v69
    %v257 = vunpack.c.l.b16 %v70
    %v258 = vunpack.c.l.b16 %v71
    %v259 = vunpack.c.l.b16 %v72
    %v260 = vunpack.c.l.b16 %v73
    %v261 = vunpack.c.l.b16 %v74
    %v262 = vunpack.c.l.b16 %v75
    %v263 = vunpack.c.l.b16 %v76
    %v264 = vunpack.c.l.b16 %v77
    %v265 = vunpack.c.l.b16 %v78
    %v266 = vunpack.c.l.b16 %v79
    %v267 = vpack.c.b16 %v252, %v251
    %v268 = vpack.c.b16 %v254, %v253
    %v269 = vpack.c.b16 %v256, %v255
    %v270 = vpack.c.b16 %v258, %v257
    %v271 = vpack.c.b16 %v260, %v259
    %v272 = vpack.c.b16 %v262, %v261
    %v273 = vpack.c.b16 %v264, %v263
    %v274 = vpack.c.b16 %v266, %v265
    %283 = vmatprep.subr.bf16.mxu0 0
    %284 = vmatpush1.bf16.msra.mxu0 %v274
    %285 = vmatprep.subr.bf16.mxu0 0
    %286 = vmatpush1.bf16.msra.mxu0 %v273
    %287 = vmatprep.subr.bf16.mxu0 0
    %288 = vmatpush1.bf16.msra.mxu0 %v272
    %289 = vmatprep.subr.bf16.mxu0 0
    %290 = vmatpush1.bf16.msra.mxu0 %v271
    %291 = vmatprep.subr.bf16.mxu0 0
    %292 = vmatpush1.bf16.msra.mxu0 %v270
    %293 = vmatprep.subr.bf16.mxu0 0
    %294 = vmatpush1.bf16.msra.mxu0 %v269
    %295 = vmatprep.subr.bf16.mxu0 0
    %296 = vmatpush1.bf16.msra.mxu0 %v268
    %297 = vmatprep.subr.bf16.mxu0 0
    %298 = vmatpush1.bf16.msra.mxu0 %v267
    %299 = vmatprep.subr.bf16.mxu0 0
    %300 = vmatpush2.bf16.msra.mxu0 0
    %301 = vmatprep.subr.bf16.mxu0 0
    %302 = vmatpush2.bf16.msra.mxu0 0
    %303 = vmatprep.subr.bf16.mxu0 0
    %304 = vmatpush2.bf16.msra.mxu0 0
    %305 = vmatprep.subr.bf16.mxu0 0
    %306 = vmatpush2.bf16.msra.mxu0 0
    %307 = vmatprep.subr.bf16.mxu0 0
    %308 = vmatpush2.bf16.msra.mxu0 0
    %309 = vmatprep.subr.bf16.mxu0 0
    %310 = vmatpush2.bf16.msra.mxu0 0
    %311 = vmatprep.subr.bf16.mxu0 0
    %312 = vmatpush2.bf16.msra.mxu0 0
    %313 = vmatprep.subr.bf16.mxu0 0
    %314 = vmatpush2.bf16.msra.mxu0 0
    %315 = vmatprep.mubr.bf16.mxu0 0
    %316 = vmatmul.mubr.bf16.gmra.mxu0 %v234
    %v317 = vpop.f32.mrf.mxu0
    %v318 = vadd.f32 0.0, %v317
    %v319 = vpop.f32.mrf.mxu0
    %v320 = vpop.f32.mrf.mxu0
    %v321 = vpop.f32.mrf.mxu0
    %322 = vdwg.mxu0
    %v323 = vlaneseq
    %v324 = vshrl.u32 %v323, 7
    %s325 = smul.u32 0, 8
    %v326 = vstv %s325
    %v327 = vadd.s32 %v324, %v326
    %v328 = vlaneseq
    %v329 = vand.u32 %v328, 127
    %s330 = sld [smem:[#allocation3]]
    %v331 = vstv %s330
    %vm332 = vcmp.lt.s32.totalorder %v327, %v331
    %vm333 = vcmp.ge.s32.totalorder %v329, 4
    %vm334 = vmand %vm332, %vm333
    %v335 = vsel %vm334, %v318, 0.0
    %336 = vadd.xlane.f32.xlu0 %v335
    %v337 = vpop.xlane.xlu0 %336
    %v338 = vrot.slane %v337, 4
    %v339 = vadd.f32 %v337, %v338
    %v340 = vrot.slane %v339, 2
    %v341 = vadd.f32 %v339, %v340
    %v342 = vrot.slane %v341, 1
    %v343 = vadd.f32 %v341, %v342
    %s344 = vtos %v343
    %p345 = scmp.eq.s32.totalorder 0, 0
    // Predicated region
    $region18: #{tpu_custom_call.1} parent=1 // pred_check
      %p346 = pneg %p345
    $region19: #{tpu_custom_call.1} parent=1 // pred_check_branch
      %348 = sbr.rel (%p346) target = $region21
    $region20: #{tpu_custom_call.1} parent=1 // pred_region
      %349 = vst [vmem:[#allocation10] sm:$0xff] 0.0
    $region21: #{tpu_custom_call.1} parent=1 // pred_fallthru
      _
    %v350 = vld [vmem:[#allocation10] sm:$0xff]
    %v351 = vstv %s344
    %v352 = vadd.f32 %v350, %v351
    %353 = vst [vmem:[#allocation10] sm:$0xff] %v352
    %354 = vst [vmem:[#allocation9] sm:$0xff] %v318
    // Predicated region
    $region22: #{tpu_custom_call.1} parent=1 // pred_check
      _
    $region23: #{tpu_custom_call.1} parent=1 // pred_check_branch
      %356 = sbr.rel (0) target = $region25
    $region24: #{tpu_custom_call.1} parent=1 // pred_region
      %s358 = ssub.s32 128, 128
      %359 = vsyncadd [#allocation6], %s358
      %s361 = sshll.u32 [#allocation9], 4
      %s362 = int_to_ptr.vmem [resolvable:$true] %s361
      %364 = dma.vmem_to_hbm [thread:$0]  %s362, 128, %s3, [#allocation6]
    $region25: #{tpu_custom_call.1} parent=1 // pred_fallthru
      _
    // Predicated region
    $region26: #{tpu_custom_call.1} parent=1 // pred_check
      _
    $region27: #{tpu_custom_call.1} parent=1 // pred_check_branch
      %366 = sbr.rel (0) target = $region29
    $region28: #{tpu_custom_call.1} parent=1 // pred_region
      %s368 = ssub.s32 128, 128
      %369 = vsyncadd [#allocation11], %s368
      %s371 = sshll.u32 [#allocation10], 4
      %s372 = int_to_ptr.vmem [resolvable:$true] %s371
      %374 = dma.vmem_to_hbm [thread:$0]  %s372, 128, %s4, [#allocation11]
    $region29: #{tpu_custom_call.1} parent=1 // pred_fallthru
      _
    // Predicated region
    $region30: #{tpu_custom_call.1} parent=1 // pred_check
      _
    $region31: #{tpu_custom_call.1} parent=1 // pred_check_branch
      %376 = sbr.rel (0) target = $region33
    $region32: #{tpu_custom_call.1} parent=1 // pred_region
      %377 = dma.done [#allocation6], 128
    $region33: #{tpu_custom_call.1} parent=1 // pred_fallthru
      _
    // Predicated region
    $region34: #{tpu_custom_call.1} parent=1 // pred_check
      _
    $region35: #{tpu_custom_call.1} parent=1 // pred_check_branch
      %379 = sbr.rel (0) target = $region37
    $region36: #{tpu_custom_call.1} parent=1 // pred_region
      %380 = dma.done [#allocation11], 128
    $region37: #{tpu_custom_call.1} parent=1 // pred_fallthru
      _
    %381 = vsyncpa [#allocation5], 1
    %382 = vsyncpa [#allocation8], 1
    %383 = vsyncpa [#allocation6], 1
    %384 = vsyncpa [#allocation11], 1

</llo_original>
